<compile_context>
chip_gen: v6e
topology: v6e:2x2x1
jax: 0.10.0
libtpu: 0.0.40
codegen_flags: <defaults>
</compile_context>

<pallas_src>
import functools

import jax
import jax.numpy as jnp
from jax.experimental import pallas as pl
from jax.experimental.pallas import tpu as pltpu

LN_EPS = 1e-5  # torch.nn.LayerNorm default


def _embed_ln_kernel(p_ref, w_ref, pgb_ref, o_ref, *, pack_rows):
    """One row tile: (tm, K)bf16 @ (K, E)bf16 -> f32, + bias, LayerNorm(E)."""
    # MXU matmul, f32 accumulation.
    acc = jnp.dot(p_ref[...], w_ref[...], preferred_element_type=jnp.float32)

    pgb = pgb_ref[...]                       # (3, E) f32: [conv bias; gamma; beta]
    acc = acc + pgb[0:1, :]                  # conv bias (must precede LN)

    # Two-pass LayerNorm statistics (numerically robust).  Cross-lane sums go
    # to the XLU and rsqrt to the EUP, both off the DMA-bound critical path.
    e_inv = 1.0 / acc.shape[-1]
    mean = jnp.sum(acc, axis=-1, keepdims=True) * e_inv
    cen = acc - mean
    var = jnp.sum(cen * cen, axis=-1, keepdims=True) * e_inv
    rstd = jax.lax.rsqrt(var + LN_EPS)

    res = (cen * rstd * pgb[1:2, :] + pgb[2:3, :]).astype(o_ref.dtype)
    if pack_rows > 1:
        # Lane-dense store for E < 128: pack `pack_rows` logical rows per stored
        # row (pure row-major repacking matching the (M//r, r*E) output view).
        res = res.reshape(o_ref.shape)
    o_ref[...] = res


def _round_up(x, m):
    return ((x + m - 1) // m) * m


def _vmem_bytes_per_row(K, E, out_bytes):
    """Lane-padding-corrected VMEM bytes per patch row inside the kernel."""
    lanes_in = _round_up(K, 128)             # (tm, K) tile is padded to 128 lanes
    lanes_out = _round_up(E, 128)
    in_b = 2 * lanes_in * 2                  # bf16 patch tile, double buffered
    out_b = out_bytes * lanes_out * 2        # output tile, double buffered
    tmp_b = 4 * lanes_out * 3                # f32 acc / centered / result temporaries
    return in_b + out_b + tmp_b


def _choose_tm(M, K, E, pack_rows, out_bytes):
    """Rows per grid step.  Prefers an exact divisor of M (no ragged block, no
    pad/slice passes); otherwise falls back to a ragged last block (Pallas masks
    the out-of-bounds output rows on writeback)."""
    per_row = _vmem_bytes_per_row(K, E, out_bytes)
    budget = 24 * 1024 * 1024                # headroom under the 32 MiB scoped limit
    align = 8 * pack_rows
    cap = max(align, min(8192, (budget // per_row) // align * align))
    min_steps = 4 if M >= 4 * align else 1   # >= 2 steps per TensorCore on v7x

    # Largest ragged tile (multiple of align) keeping >= min_steps grid steps.
    tm_ragged = align
    while tm_ragged * 2 <= cap and pl.cdiv(M, tm_ragged * 2) >= min_steps:
        tm_ragged *= 2
    # Largest exact divisor of M within the cap.
    tm_div = 0
    d = align
    while d <= cap:
        if M % d == 0 and M // d >= min_steps:
            tm_div = d
        d += align
    # Prefer the exact divisor unless it would more than double the step count.
    if tm_div * 2 >= tm_ragged:
        return tm_div
    return tm_ragged


def _embed_matmul_ln(patches2d, w_mat, pgb, *, tm, pack_rows, out_dtype):
    """patches2d: (M, K) bf16; returns (M // r, r*E) in out_dtype (row-major view
    of the logical (M, E) output)."""
    M, K = patches2d.shape
    E = w_mat.shape[1]
    r = pack_rows
    grid = (pl.cdiv(M, tm),)                 # ragged last block handled by Pallas
    kernel = functools.partial(_embed_ln_kernel, pack_rows=r)
    return pl.pallas_call(
        kernel,
        out_shape=jax.ShapeDtypeStruct((M // r, r * E), out_dtype),
        grid_spec=pltpu.PrefetchScalarGridSpec(
            num_scalar_prefetch=0,
            grid=grid,
            in_specs=[
                # Streaming patch rows.  Default double buffering is kept: the
                # output writeback dominates the byte count, so deeper input
                # buffering (pl.Buffered(3)) would waste VMEM better spent on tm.
                pl.BlockSpec((tm, K), lambda i: (i, 0)),
                # Weight and stacked bias/gamma/beta stay resident (constant index).
                pl.BlockSpec((K, E), lambda i: (0, 0)),
                pl.BlockSpec((3, E), lambda i: (0, 0)),
            ],
            out_specs=pl.BlockSpec((tm // r, r * E), lambda i: (i, 0)),
        ),
        compiler_params=pltpu.CompilerParams(
            dimension_semantics=("parallel",),        # shard row blocks across TCs
            vmem_limit_bytes=32 * 1024 * 1024,        # legal on v5e/v6e/v7x
        ),
    )(patches2d, w_mat, pgb)


def _im2col_k2_s2_p1(x, feat_dtype=jnp.bfloat16):
    """im2col for kernel=2, stride=2, padding=1 (non-overlapping on padded vol).

    x: (B, C, H, W, D) -> patches: (B, N, C*8) in `feat_dtype`, plus (Ho, Wo, Do).
    Feature order is (c, kh, kw, kd), matching Conv3d weight layout.  The cast
    happens BEFORE the pad/reshape/transpose so the fused XLA layout copy moves
    half the bytes.  (TODO(synk): replace with an in-kernel strided-DMA gather.)
    """
    B, C, H, W, D = x.shape
    x = x.astype(feat_dtype)
    xp = jnp.pad(x, ((0, 0), (0, 0), (1, 1), (1, 1), (1, 1)))
    Hp, Wp, Dp = H + 2, W + 2, D + 2
    Ho, Wo, Do = Hp // 2, Wp // 2, Dp // 2
    xp = xp.reshape(B, C, Ho, 2, Wo, 2, Do, 2)
    xp = jnp.transpose(xp, (0, 2, 4, 6, 1, 3, 5, 7))
    patches = xp.reshape(B, Ho * Wo * Do, C * 8)
    return patches, Ho, Wo, Do


def _forward(x, conv_w, conv_b, ln_w, ln_b, *, out_dtype):
    B, C, H, W, D = x.shape
    E = conv_w.shape[0]
    K = C * 8

    patches, Ho, Wo, Do = _im2col_k2_s2_p1(x)          # (B, N, K) bf16
    N = Ho * Wo * Do
    M = B * N
    patches2d = patches.reshape(M, K)

    # Lane-dense output packing when E < 128 (avoids masked vst.msk stores).
    r = 1
    if E < 128 and 128 % E == 0 and M % (128 // E) == 0:
        r = 128 // E

    out_bytes = jnp.dtype(out_dtype).itemsize
    tm = _choose_tm(M, K, E, r, out_bytes)

    w_mat = conv_w.reshape(E, K).T.astype(jnp.bfloat16)                  # (K, E)
    pgb = jnp.stack([conv_b, ln_w, ln_b], axis=0).astype(jnp.float32)    # (3, E)

    out2d = _embed_matmul_ln(patches2d, w_mat, pgb, tm=tm, pack_rows=r,
                             out_dtype=out_dtype)
    # (M // r, r*E) -> (B, N, E): pure view of the same row-major buffer.
    return out2d.reshape(B, N, E)


_forward_jit = jax.jit(_forward, static_argnames=("out_dtype",))


def overlap_patch_embed(x, conv_w, conv_b, ln_w, ln_b, *, out_dtype=jnp.float32):
    """Forward pass of OverlapPatchEmbed.

    x:       (B, C, H, W, D) float32 (even H, W, D)
    conv_w:  (E, C, 2, 2, 2)   Conv3d weight
    conv_b:  (E,)              Conv3d bias
    ln_w:    (E,)              LayerNorm weight
    ln_b:    (E,)              LayerNorm bias
    out_dtype: float32 (module semantics) or bfloat16 (halves output HBM traffic
               if the consumer accepts it); accumulation / LN math is always f32.
    returns: (out (B, N, E) out_dtype, H_out, W_out, D_out)
    """
    B, C, H, W, D = x.shape
    assert H % 2 == 0 and W % 2 == 0 and D % 2 == 0, "even spatial dims expected"
    Ho, Wo, Do = (H + 2) // 2, (W + 2) // 2, (D + 2) // 2
    out = _forward_jit(x, conv_w, conv_b, ln_w, ln_b, out_dtype=out_dtype)
    return out, Ho, Wo, Do


def _reference(x, conv_w, conv_b, ln_w, ln_b):
    """Pure-JAX reference (full f32) using lax 3D conv + layernorm."""
    y = jax.lax.conv_general_dilated(
        x, conv_w, window_strides=(2, 2, 2),
        padding=((1, 1), (1, 1), (1, 1)),
        dimension_numbers=("NCDHW", "OIDHW", "NCDHW"),
        precision=jax.lax.Precision.HIGHEST)
    y = y + conv_b[None, :, None, None, None]
    B, E, Ho, Wo, Do = y.shape
    y = y.reshape(B, E, Ho * Wo * Do).transpose(0, 2, 1)   # (B, N, E)
    mean = jnp.mean(y, axis=-1, keepdims=True)
    var = jnp.mean((y - mean) ** 2, axis=-1, keepdims=True)
    y = (y - mean) / jnp.sqrt(var + LN_EPS)
    return y * ln_w + ln_b, Ho, Wo, Do


if __name__ == "__main__":
    key = jax.random.PRNGKey(0)
    k_x, k_w, k_b = jax.random.split(key, 3)

    B, C, H, W, D = 2, 4, 14, 14, 14   # small, even spatial dims -> Ho=Wo=Do=8
    E = 128                            # embed_dim (module default)

    x = jax.random.normal(k_x, (B, C, H, W, D), dtype=jnp.float32)
    # Deterministic synthetic parameters (module init shapes).
    conv_w = 0.05 * jax.random.normal(k_w, (E, C, 2, 2, 2), dtype=jnp.float32)
    conv_b = 0.01 * jax.random.normal(k_b, (E,), dtype=jnp.float32)
    ln_w = jnp.ones((E,), dtype=jnp.float32)    # LayerNorm init: weight=1
    ln_b = jnp.zeros((E,), dtype=jnp.float32)   # LayerNorm init: bias=0

    out, Ho, Wo, Do = overlap_patch_embed(x, conv_w, conv_b, ln_w, ln_b)
    out = jax.block_until_ready(out)

    ref, rHo, rWo, rDo = _reference(x, conv_w, conv_b, ln_w, ln_b)
    assert (Ho, Wo, Do) == (rHo, rWo, rDo)
    assert out.shape == (B, Ho * Wo * Do, E)
    assert out.dtype == jnp.float32
    # Kernel uses bf16 MXU operands with f32 accumulation + f32 two-pass
    # LayerNorm; the per-element difference vs. the all-f32 reference is
    # bounded well below this tolerance at these magnitudes.
    assert jnp.allclose(out, ref, atol=5e-2, rtol=5e-2)

    print("KERNEL_OK")
</pallas_src>

<mosaic_0001>
module attributes {stable_mosaic.version = 11 : i64} {
  func.func @_embed_ln_kernel(%arg0: i32, %arg1: memref<256x32xbf16, #tpu.memory_space<vmem>>, %arg2: memref<32x128xbf16, #tpu.memory_space<vmem>>, %arg3: memref<3x128xf32, #tpu.memory_space<vmem>>, %arg4: memref<256x128xf32, #tpu.memory_space<vmem>>) attributes {dimension_semantics = [#tpu.dimension_semantics<parallel>], iteration_bounds = array<i64: 4>, scalar_prefetch = 0 : i64, scratch_operands = 0 : i64, tpu.core_type = #tpu.core_type<tc>, window_params = [{transform_indices = @transform_0, window_bounds = array<i64: 256, 32>}, {pipeline_mode = #tpu.pipeline_mode<synchronous>, transform_indices = @transform_1, window_bounds = array<i64: 32, 128>}, {pipeline_mode = #tpu.pipeline_mode<synchronous>, transform_indices = @transform_2, window_bounds = array<i64: 3, 128>}, {transform_indices = @transform_3, window_bounds = array<i64: 256, 128>}]} {
    %c0 = arith.constant 0 : index
    %c0_0 = arith.constant 0 : index
    %0 = vector.load %arg1[%c0, %c0_0] : memref<256x32xbf16, #tpu.memory_space<vmem>>, vector<256x32xbf16>
    %c0_1 = arith.constant 0 : index
    %c0_2 = arith.constant 0 : index
    %1 = vector.load %arg2[%c0_1, %c0_2] : memref<32x128xbf16, #tpu.memory_space<vmem>>, vector<32x128xbf16>
    %cst = arith.constant dense<0.000000e+00> : vector<256x128xf32>
    %2 = tpu.matmul %0, %1, %cst {dimension_numbers = #tpu.dot_dimension_numbers<[1], [0], [0], [1], [0, 0, 1, 1], [], []>} : vector<256x32xbf16>, vector<32x128xbf16>, vector<256x128xf32> -> vector<256x128xf32>
    %c0_3 = arith.constant 0 : index
    %c0_4 = arith.constant 0 : index
    %3 = vector.load %arg3[%c0_3, %c0_4] : memref<3x128xf32, #tpu.memory_space<vmem>>, vector<3x128xf32>
    %4 = vector.extract_strided_slice %3 {offsets = [0, 0], sizes = [1, 128], strides = [1, 1]} : vector<3x128xf32> to vector<1x128xf32>
    %5 = vector.broadcast %4 : vector<1x128xf32> to vector<256x128xf32>
    %6 = arith.addf %2, %5 : vector<256x128xf32>
    %cst_5 = arith.constant dense<0.000000e+00> : vector<256xf32>
    %7 = vector.multi_reduction <add>, %6, %cst_5 [1] : vector<256x128xf32> to vector<256xf32>
    %8 = vector.shape_cast %7 : vector<256xf32> to vector<256x1xf32>
    %cst_6 = arith.constant 7.812500e-03 : f32
    %9 = vector.broadcast %cst_6 : f32 to vector<256x1xf32>
    %10 = arith.mulf %8, %9 : vector<256x1xf32>
    %11 = vector.broadcast %10 : vector<256x1xf32> to vector<256x128xf32>
    %12 = arith.subf %6, %11 : vector<256x128xf32>
    %13 = arith.mulf %12, %12 : vector<256x128xf32>
    %cst_7 = arith.constant dense<0.000000e+00> : vector<256xf32>
    %14 = vector.multi_reduction <add>, %13, %cst_7 [1] : vector<256x128xf32> to vector<256xf32>
    %15 = vector.shape_cast %14 : vector<256xf32> to vector<256x1xf32>
    %cst_8 = arith.constant 7.812500e-03 : f32
    %16 = vector.broadcast %cst_8 : f32 to vector<256x1xf32>
    %17 = arith.mulf %15, %16 : vector<256x1xf32>
    %cst_9 = arith.constant 9.99999974E-6 : f32
    %18 = vector.broadcast %cst_9 : f32 to vector<256x1xf32>
    %19 = arith.addf %17, %18 : vector<256x1xf32>
    %20 = math.rsqrt %19 : vector<256x1xf32>
    %21 = vector.broadcast %20 : vector<256x1xf32> to vector<256x128xf32>
    %22 = arith.mulf %12, %21 : vector<256x128xf32>
    %23 = vector.extract_strided_slice %3 {offsets = [1, 0], sizes = [1, 128], strides = [1, 1]} : vector<3x128xf32> to vector<1x128xf32>
    %24 = vector.broadcast %23 : vector<1x128xf32> to vector<256x128xf32>
    %25 = arith.mulf %22, %24 : vector<256x128xf32>
    %26 = vector.extract_strided_slice %3 {offsets = [2, 0], sizes = [1, 128], strides = [1, 1]} : vector<3x128xf32> to vector<1x128xf32>
    %27 = vector.broadcast %26 : vector<1x128xf32> to vector<256x128xf32>
    %28 = arith.addf %25, %27 : vector<256x128xf32>
    %c0_10 = arith.constant 0 : index
    %c0_11 = arith.constant 0 : index
    %29 = vector.load %arg4[%c0_10, %c0_11] : memref<256x128xf32, #tpu.memory_space<vmem>>, vector<256x128xf32>
    tpu.vector_store %arg4[%c0_10, %c0_11], %28 {strides = array<i32>} : memref<256x128xf32, #tpu.memory_space<vmem>>, vector<256x128xf32>,
    return
  }
  func.func @transform_0(%arg0: i32) -> (i32, i32) {
    %c0_i32 = arith.constant 0 : i32
    %c0_i32_0 = arith.constant 0 : i32
    return %arg0, %c0_i32 : i32, i32
  }
  func.func @transform_1(%arg0: i32) -> (i32, i32) {
    %c0_i32 = arith.constant 0 : i32
    %c0_i32_0 = arith.constant 0 : i32
    %c0_i32_1 = arith.constant 0 : i32
    return %c0_i32, %c0_i32_0 : i32, i32
  }
  func.func @transform_2(%arg0: i32) -> (i32, i32) {
    %c0_i32 = arith.constant 0 : i32
    %c0_i32_0 = arith.constant 0 : i32
    %c0_i32_1 = arith.constant 0 : i32
    return %c0_i32, %c0_i32_0 : i32, i32
  }
  func.func @transform_3(%arg0: i32) -> (i32, i32) {
    %c0_i32 = arith.constant 0 : i32
    %c0_i32_0 = arith.constant 0 : i32
    return %arg0, %c0_i32 : i32, i32
  }
}

</mosaic_0001>

<llo_original>
// kernel: _forward.1
$region0: #{_forward.1}
  #allocation0 [shape = 'u32[]', space=smem, size = 0x4, offset = 0x4, fixed_abs, tag = 'smem constant byte address 0x4 - core index']
  #allocation1 [shape = 'u32[144,128]{1,0:T(1,128)}', space=vmem, size = 0x12000, scoped, tag = 'internal scratch']
  %s0 = inlined_call_operand.vmem [shape: bf16[1024,32], index: 0, kind: input, shape index: {}]
  %s1 = inlined_call_operand.vmem [shape: bf16[32,128], index: 1, kind: input, shape index: {}]
  %s2 = inlined_call_operand.vmem [shape: f32[3,128], index: 2, kind: input, shape index: {}]
  %s3 = inlined_call_operand.hbm [shape: f32[1024,128], index: 3, kind: output, shape index: {}]
  %s4 = sld [smem:[#allocation0]]
  $region45: #{_forward.1} parent=0
    _
  %s6 = ssub.s32 1, %s4
  %s7 = scalar_select 0, %s6, %s4
  $region1: #{_forward.1} parent=0
    #allocation2 [shape = 'u8[262144]{0}', space=vmem, size = 0x40000, scoped, tag = 'output window, operand 0']
    #allocation3 [shape = 's32[2]{0}', space=sflag, size = 0x8, scoped, tag = 'scoped memory for _forward.1']
    %8 = vsyncpa [#allocation3], 0
    %s9 = scalar_lea.sflag [#allocation3], 1
    %10 = vsyncpa %s9, 0
    loop: start=0, step=1, limit=6
    $region2: #{_forward.1} parent=1 // loop_pre_header
      _
    $region3: #{_forward.1} parent=1 // loop_header
      %s12 = sphi 0, %s16
      %p13 = scmp.ge.s32.totalorder %s12, 6
      %s22 = sphi 0, %s24
      %s25 = sphi 0, %s22
      %s26 = sphi 0, %s25
      %s42 = sphi 0, %s26
      %s46 = sphi 0, %s46
      %s48 = sphi 0, %s46
      %s49 = sphi 0, %s48
      %s63 = sphi 0, %s49
      %s67 = sphi 0, %s67
      %s69 = sphi 0, %s67
      %s70 = sphi 0, %s69
      %s84 = sphi 0, %s70
      %s90 = sphi 0, %s92
      %s93 = sphi 0, %s90
      %s94 = sphi 0, %s93
      %s110 = sphi 0, %s94
    $region4: #{_forward.1} parent=1 // loop_header_branch
      %15 = sbr.rel (%p13) target = $region8
    $region5: #{_forward.1} parent=1 // loop_body
      %s17 = ssub.s32 %s12, 1
      %s18 = ssub.s32 %s12, 2
      %s19 = sadd.s32 %s12, 1
      %s20 = ssub.s32 %s12, %s19
      %p21 = scmp.eq.s32.totalorder %s20, 0
      %s23 = sadd.s32 %s22, 1
      %s24 = scalar_select %p21, %s22, %s23
      %p27 = pneg %p21
      %p28 = scmp.eq.s32.totalorder %s12, 3
      %p29 = por %p27, %p28
      %p30 = scmp.ne.s32.totalorder %s22, %s25
      %p31 = scmp.eq.s32.totalorder %s12, 0
      %p32 = por %p30, %p31
      %p33 = scmp.ne.s32.totalorder %s22, %s25
      %p34 = scmp.eq.s32.totalorder %s17, 3
      %p35 = por %p33, %p34
      %p36 = scmp.ne.s32.totalorder %s25, %s26
      %p37 = scmp.eq.s32.totalorder %s17, 0
      %p38 = por %p36, %p37
      %p39 = scmp.ne.s32.totalorder %s25, %s26
      %p40 = scmp.eq.s32.totalorder %s18, 3
      %p41 = por %p39, %p40
      %p43 = scmp.ne.s32.totalorder %s26, %s42
      %p44 = scmp.eq.s32.totalorder %s18, 0
      %p45 = por %p43, %p44
      %s47 = sadd.s32 %s46, 1
      %p50 = scmp.eq.s32.totalorder %s12, 3
      %p51 = scmp.ne.s32.totalorder %s46, %s48
      %p52 = scmp.eq.s32.totalorder %s12, 0
      %p53 = por %p51, %p52
      %p54 = scmp.ne.s32.totalorder %s46, %s48
      %p55 = scmp.eq.s32.totalorder %s17, 3
      %p56 = por %p54, %p55
      %p57 = scmp.ne.s32.totalorder %s48, %s49
      %p58 = scmp.eq.s32.totalorder %s17, 0
      %p59 = por %p57, %p58
      %p60 = scmp.ne.s32.totalorder %s48, %s49
      %p61 = scmp.eq.s32.totalorder %s18, 3
      %p62 = por %p60, %p61
      %p64 = scmp.ne.s32.totalorder %s49, %s63
      %p65 = scmp.eq.s32.totalorder %s18, 0
      %p66 = por %p64, %p65
      %s68 = sadd.s32 %s67, 1
      %p71 = scmp.eq.s32.totalorder %s12, 3
      %p72 = scmp.ne.s32.totalorder %s67, %s69
      %p73 = scmp.eq.s32.totalorder %s12, 0
      %p74 = por %p72, %p73
      %p75 = scmp.ne.s32.totalorder %s67, %s69
      %p76 = scmp.eq.s32.totalorder %s17, 3
      %p77 = por %p75, %p76
      %p78 = scmp.ne.s32.totalorder %s69, %s70
      %p79 = scmp.eq.s32.totalorder %s17, 0
      %p80 = por %p78, %p79
      %p81 = scmp.ne.s32.totalorder %s69, %s70
      %p82 = scmp.eq.s32.totalorder %s18, 3
      %p83 = por %p81, %p82
      %p85 = scmp.ne.s32.totalorder %s70, %s84
      %p86 = scmp.eq.s32.totalorder %s18, 0
      %p87 = por %p85, %p86
      %s88 = ssub.s32 %s12, %s19
      %p89 = scmp.eq.s32.totalorder %s88, 0
      %s91 = sadd.s32 %s90, 1
      %s92 = scalar_select %p89, %s90, %s91
      %p95 = pneg %p89
      %p96 = scmp.eq.s32.totalorder %s12, 3
      %p97 = por %p95, %p96
      %p98 = scmp.ne.s32.totalorder %s90, %s93
      %p99 = scmp.eq.s32.totalorder %s12, 0
      %p100 = por %p98, %p99
      %p101 = scmp.ne.s32.totalorder %s90, %s93
      %p102 = scmp.eq.s32.totalorder %s17, 3
      %p103 = por %p101, %p102
      %p104 = scmp.ne.s32.totalorder %s93, %s94
      %p105 = scmp.eq.s32.totalorder %s17, 0
      %p106 = por %p104, %p105
      %p107 = scmp.ne.s32.totalorder %s93, %s94
      %p108 = scmp.eq.s32.totalorder %s18, 3
      %p109 = por %p107, %p108
      %p111 = scmp.ne.s32.totalorder %s94, %s110
      %p112 = scmp.eq.s32.totalorder %s18, 0
      %p113 = por %p111, %p112
      %p114 = scmp.le.s32.totalorder 1, %s12
      %p115 = scmp.lt.s32.totalorder %s12, 5
      %p116 = pnand %p114, %p115
      %p117 = pneg %p116
      // Predicated region
      $region9: #{_forward.1} parent=5 // pred_check
        _
      $region10: #{_forward.1} parent=5 // pred_check_branch
        %119 = sbr.rel (%p116) target = $region12
      $region11: #{_forward.1} parent=5 // pred_region
        %s120 = ssub.s32 %s12, 1
        // Predicated region
        $region13: #{_forward.1} parent=11 // pred_check
          %p121 = pneg %p59
        $region14: #{_forward.1} parent=11 // pred_check_branch
          %123 = sbr.rel (%p121) target = $region16
        $region15: #{_forward.1} parent=11 // pred_region
          _
        $region16: #{_forward.1} parent=11 // pred_fallthru
          _
        // Predicated region
        $region17: #{_forward.1} parent=11 // pred_check
          %p124 = pneg %p80
        $region18: #{_forward.1} parent=11 // pred_check_branch
          %126 = sbr.rel (%p124) target = $region20
        $region19: #{_forward.1} parent=11 // pred_region
          _
        $region20: #{_forward.1} parent=11 // pred_fallthru
          _
      $region12: #{_forward.1} parent=5 // pred_fallthru
        _
      %p127 = scmp.lt.s32.totalorder %s12, 4
      // Predicated region
      $region21: #{_forward.1} parent=5 // pred_check
        %p128 = pneg %p127
      $region22: #{_forward.1} parent=5 // pred_check_branch
        %130 = sbr.rel (%p128) target = $region24
      $region23: #{_forward.1} parent=5 // pred_region
        // Predicated region
        $region25: #{_forward.1} parent=23 // pred_check
          %p131 = pneg %p32
        $region26: #{_forward.1} parent=23 // pred_check_branch
          %133 = sbr.rel (%p131) target = $region28
        $region27: #{_forward.1} parent=23 // pred_region
          %s134 = smul.u32 32, %s12
          %p135 = scmp.lt.s32.totalorder %s134, 127
          %s136 = scalar_select %p135, %s134, 127
          %s137 = smul.addr %s136, 4
          %s138 = scalar_lea.vmem %s0, %s137
          %s139 = smul.u32 32, %s12
        $region28: #{_forward.1} parent=23 // pred_fallthru
          _
      $region24: #{_forward.1} parent=5 // pred_fallthru
        _
      %p140 = scmp.le.s32.totalorder 1, %s12
      %p141 = scmp.lt.s32.totalorder %s12, 5
      %p142 = pnand %p140, %p141
      %p143 = pneg %p142
      // Predicated region
      $region29: #{_forward.1} parent=5 // pred_check
        _
      $region30: #{_forward.1} parent=5 // pred_check_branch
        %145 = sbr.rel (%p142) target = $region32
      $region31: #{_forward.1} parent=5 // pred_region
        %s146 = ssub.s32 %s12, 1
        %s147 = smul.u32 32, %s17
        %p148 = scmp.lt.s32.totalorder %s147, 127
        %s149 = scalar_select %p148, %s147, 127
        %s150 = smul.addr %s149, 4
        %s151 = scalar_lea.vmem %s0, %s150
        %p152 = pneg %p38
        %p153 = pneg %p35
        %p154 = pneg %p59
        %p155 = pneg %p56
        %p156 = pneg %p80
        %p157 = pneg %p77
        %p158 = pneg %p106
        %p159 = pneg %p103
        %s160 = sand.u32 %s93, 1
        %s161 = scalar_lea.sflag [#allocation3], %s160
        %s162 = sand.u32 %s93, 1
        %s163 = smul.addr %s162, 256
        %s164 = scalar_lea.vmem [#allocation2], %s163
        %s165 = smul.u32 32, %s17
        %p166 = scmp.lt.s32.totalorder %s165, 127
        %s167 = scalar_select %p166, %s165, 127
        %s168 = smul.addr %s167, 4
        %s169 = scalar_lea.vmem %s0, %s168
        %s170 = smul.u32 32, %s17
        %s171 = smul.u32 32, %s17
        %v173 = vld [vmem:[%s169] sm:$0xf]
        %v174 = vld [vmem:[%s169 + $0x4] sm:$0xf]
        %v175 = vld [vmem:[%s169 + $0x8] sm:$0xf]
        %v176 = vld [vmem:[%s169 + $0xc] sm:$0xf]
        %v177 = vld [vmem:[%s169 + $0x10] sm:$0xf]
        %v178 = vld [vmem:[%s169 + $0x14] sm:$0xf]
        %v179 = vld [vmem:[%s169 + $0x18] sm:$0xf]
        %v180 = vld [vmem:[%s169 + $0x1c] sm:$0xf]
        %v181 = vld [vmem:[%s169 + $0x20] sm:$0xf]
        %v182 = vld [vmem:[%s169 + $0x24] sm:$0xf]
        %v183 = vld [vmem:[%s169 + $0x28] sm:$0xf]
        %v184 = vld [vmem:[%s169 + $0x2c] sm:$0xf]
        %v185 = vld [vmem:[%s169 + $0x30] sm:$0xf]
        %v186 = vld [vmem:[%s169 + $0x34] sm:$0xf]
        %v187 = vld [vmem:[%s169 + $0x38] sm:$0xf]
        %v188 = vld [vmem:[%s169 + $0x3c] sm:$0xf]
        %v189 = vld [vmem:[%s169 + $0x40] sm:$0xf]
        %v190 = vld [vmem:[%s169 + $0x44] sm:$0xf]
        %v191 = vld [vmem:[%s169 + $0x48] sm:$0xf]
        %v192 = vld [vmem:[%s169 + $0x4c] sm:$0xf]
        %v193 = vld [vmem:[%s169 + $0x50] sm:$0xf]
        %v194 = vld [vmem:[%s169 + $0x54] sm:$0xf]
        %v195 = vld [vmem:[%s169 + $0x58] sm:$0xf]
        %v196 = vld [vmem:[%s169 + $0x5c] sm:$0xf]
        %v197 = vld [vmem:[%s169 + $0x60] sm:$0xf]
        %v198 = vld [vmem:[%s169 + $0x64] sm:$0xf]
        %v199 = vld [vmem:[%s169 + $0x68] sm:$0xf]
        %v200 = vld [vmem:[%s169 + $0x6c] sm:$0xf]
        %v201 = vld [vmem:[%s169 + $0x70] sm:$0xf]
        %v202 = vld [vmem:[%s169 + $0x74] sm:$0xf]
        %v203 = vld [vmem:[%s169 + $0x78] sm:$0xf]
        %v204 = vld [vmem:[%s169 + $0x7c] sm:$0xf]
        %v205 = vld [vmem:[%s1] sm:$0xf]
        %v206 = vld [vmem:[%s1 + $0x4] sm:$0xf]
        %v207 = vld [vmem:[%s1 + $0x8] sm:$0xf]
        %v208 = vld [vmem:[%s1 + $0xc] sm:$0xf]
        %v209 = vld [vmem:[%s2] sm:$0x7]
        %v210 = vlaneseq
        %v211 = vshrl.u32 %v210, 7
        %v212 = vsub.s32 0, %v211
        %v213 = vrot.slane %v209, %v212
        %v246 = vunpack.c.l.b16 %v173
        %v247 = vunpack.c.l.b16 %v174
        %v248 = vunpack.c.l.b16 %v175
        %v249 = vunpack.c.l.b16 %v176
        %v250 = vunpack.c.l.b16 %v177
        %v251 = vunpack.c.l.b16 %v178
        %v252 = vunpack.c.l.b16 %v179
        %v253 = vunpack.c.l.b16 %v180
        %v254 = vunpack.c.l.b16 %v181
        %v255 = vunpack.c.l.b16 %v182
        %v256 = vunpack.c.l.b16 %v183
        %v257 = vunpack.c.l.b16 %v184
        %v258 = vunpack.c.l.b16 %v185
        %v259 = vunpack.c.l.b16 %v186
        %v260 = vunpack.c.l.b16 %v187
        %v261 = vunpack.c.l.b16 %v188
        %v262 = vunpack.c.l.b16 %v189
        %v263 = vunpack.c.l.b16 %v190
        %v264 = vunpack.c.l.b16 %v191
        %v265 = vunpack.c.l.b16 %v192
        %v266 = vunpack.c.l.b16 %v193
        %v267 = vunpack.c.l.b16 %v194
        %v268 = vunpack.c.l.b16 %v195
        %v269 = vunpack.c.l.b16 %v196
        %v270 = vunpack.c.l.b16 %v197
        %v271 = vunpack.c.l.b16 %v198
        %v272 = vunpack.c.l.b16 %v199
        %v273 = vunpack.c.l.b16 %v200
        %v274 = vunpack.c.l.b16 %v201
        %v275 = vunpack.c.l.b16 %v202
        %v276 = vunpack.c.l.b16 %v203
        %v277 = vunpack.c.l.b16 %v204
        %v278 = vpack.c.b16 %v247, %v246
        %v279 = vpack.c.b16 %v249, %v248
        %v280 = vpack.c.b16 %v251, %v250
        %v281 = vpack.c.b16 %v253, %v252
        %v282 = vpack.c.b16 %v255, %v254
        %v283 = vpack.c.b16 %v257, %v256
        %v284 = vpack.c.b16 %v259, %v258
        %v285 = vpack.c.b16 %v261, %v260
        %v286 = vpack.c.b16 %v263, %v262
        %v287 = vpack.c.b16 %v265, %v264
        %v288 = vpack.c.b16 %v267, %v266
        %v289 = vpack.c.b16 %v269, %v268
        %v290 = vpack.c.b16 %v271, %v270
        %v291 = vpack.c.b16 %v273, %v272
        %v292 = vpack.c.b16 %v275, %v274
        %v293 = vpack.c.b16 %v277, %v276
        %v298 = vunpack.c.l.b16 %v205
        %v299 = vunpack.c.l.b16 %v206
        %v300 = vunpack.c.l.b16 %v207
        %v301 = vunpack.c.l.b16 %v208
        %v302 = vpack.c.b16 %v299, %v298
        %v303 = vpack.c.b16 %v301, %v300
        %vm306 = vcmask 261120
        %v308 = vsel %vm306, %v278, 0
        %v311 = vsel %vm306, %v279, 0
        %v314 = vsel %vm306, %v280, 0
        %v317 = vsel %vm306, %v281, 0
        %v320 = vsel %vm306, %v282, 0
        %v323 = vsel %vm306, %v283, 0
        %v326 = vsel %vm306, %v284, 0
        %v329 = vsel %vm306, %v285, 0
        %v332 = vsel %vm306, %v286, 0
        %v335 = vsel %vm306, %v287, 0
        %v338 = vsel %vm306, %v288, 0
        %v341 = vsel %vm306, %v289, 0
        %v344 = vsel %vm306, %v290, 0
        %v347 = vsel %vm306, %v291, 0
        %v350 = vsel %vm306, %v292, 0
        %v353 = vsel %vm306, %v293, 0
        %355 = vmatprep.subr.bf16.mxu0 0
        %356 = vmatpush1.bf16.msra.mxu0 0
        %357 = vmatprep.subr.bf16.mxu0 0
        %358 = vmatpush1.bf16.msra.mxu0 0
        %359 = vmatprep.subr.bf16.mxu0 0
        %360 = vmatpush1.bf16.msra.mxu0 0
        %361 = vmatprep.subr.bf16.mxu0 0
        %362 = vmatpush1.bf16.msra.mxu0 0
        %363 = vmatprep.subr.bf16.mxu0 0
        %364 = vmatpush1.bf16.msra.mxu0 0
        %365 = vmatprep.subr.bf16.mxu0 0
        %366 = vmatpush1.bf16.msra.mxu0 0
        %367 = vmatprep.subr.bf16.mxu0 0
        %368 = vmatpush1.bf16.msra.mxu0 %v303
        %369 = vmatprep.subr.bf16.mxu0 0
        %370 = vmatpush1.bf16.msra.mxu0 %v302
        %371 = vmatprep.subr.bf16.mxu0 0
        %372 = vmatpush2.bf16.msra.mxu0 0
        %373 = vmatprep.subr.bf16.mxu0 0
        %374 = vmatpush2.bf16.msra.mxu0 0
        %375 = vmatprep.subr.bf16.mxu0 0
        %376 = vmatpush2.bf16.msra.mxu0 0
        %377 = vmatprep.subr.bf16.mxu0 0
        %378 = vmatpush2.bf16.msra.mxu0 0
        %379 = vmatprep.subr.bf16.mxu0 0
        %380 = vmatpush2.bf16.msra.mxu0 0
        %381 = vmatprep.subr.bf16.mxu0 0
        %382 = vmatpush2.bf16.msra.mxu0 0
        %383 = vmatprep.subr.bf16.mxu0 0
        %384 = vmatpush2.bf16.msra.mxu0 0
        %385 = vmatprep.subr.bf16.mxu0 0
        %386 = vmatpush2.bf16.msra.mxu0 0
        %387 = vmatprep.mubr.bf16.mxu0 0
        %388 = vmatmul.mubr.bf16.gmra.mxu0 %v308
        %v389 = vpop.f32.mrf.mxu0
        %v390 = vadd.f32 %v213, %v389
        %v391 = vpop.f32.mrf.mxu0
        %v392 = vpop.f32.mrf.mxu0
        %v393 = vadd.f32 %v213, %v392
        %v394 = vpop.f32.mrf.mxu0
        %395 = vmatprep.mubr.bf16.mxu0 0
        %396 = vmatmul.mubr.bf16.gmra.mxu0 %v311
        %v397 = vpop.f32.mrf.mxu0
        %v398 = vadd.f32 %v213, %v397
        %v399 = vpop.f32.mrf.mxu0
        %v400 = vpop.f32.mrf.mxu0
        %v401 = vadd.f32 %v213, %v400
        %v402 = vpop.f32.mrf.mxu0
        %403 = vmatprep.mubr.bf16.mxu0 0
        %404 = vmatmul.mubr.bf16.gmra.mxu0 %v314
        %v405 = vpop.f32.mrf.mxu0
        %v406 = vadd.f32 %v213, %v405
        %v407 = vpop.f32.mrf.mxu0
        %v408 = vpop.f32.mrf.mxu0
        %v409 = vadd.f32 %v213, %v408
        %v410 = vpop.f32.mrf.mxu0
        %411 = vmatprep.mubr.bf16.mxu0 0
        %412 = vmatmul.mubr.bf16.gmra.mxu0 %v317
        %v413 = vpop.f32.mrf.mxu0
        %v414 = vadd.f32 %v213, %v413
        %v415 = vpop.f32.mrf.mxu0
        %v416 = vpop.f32.mrf.mxu0
        %v417 = vadd.f32 %v213, %v416
        %v418 = vpop.f32.mrf.mxu0
        %419 = vmatprep.mubr.bf16.mxu0 0
        %420 = vmatmul.mubr.bf16.gmra.mxu0 %v320
        %v421 = vpop.f32.mrf.mxu0
        %v422 = vadd.f32 %v213, %v421
        %v423 = vpop.f32.mrf.mxu0
        %v424 = vpop.f32.mrf.mxu0
        %v425 = vadd.f32 %v213, %v424
        %v426 = vpop.f32.mrf.mxu0
        %427 = vmatprep.mubr.bf16.mxu0 0
        %428 = vmatmul.mubr.bf16.gmra.mxu0 %v323
        %v429 = vpop.f32.mrf.mxu0
        %v430 = vadd.f32 %v213, %v429
        %v431 = vpop.f32.mrf.mxu0
        %v432 = vpop.f32.mrf.mxu0
        %v433 = vadd.f32 %v213, %v432
        %v434 = vpop.f32.mrf.mxu0
        %435 = vmatprep.mubr.bf16.mxu0 0
        %436 = vmatmul.mubr.bf16.gmra.mxu0 %v326
        %v437 = vpop.f32.mrf.mxu0
        %v438 = vadd.f32 %v213, %v437
        %v439 = vpop.f32.mrf.mxu0
        %v440 = vpop.f32.mrf.mxu0
        %v441 = vadd.f32 %v213, %v440
        %v442 = vpop.f32.mrf.mxu0
        %443 = vmatprep.mubr.bf16.mxu0 0
        %444 = vmatmul.mubr.bf16.gmra.mxu0 %v329
        %v445 = vpop.f32.mrf.mxu0
        %v446 = vadd.f32 %v213, %v445
        %v447 = vpop.f32.mrf.mxu0
        %v448 = vpop.f32.mrf.mxu0
        %v449 = vadd.f32 %v213, %v448
        %v450 = vpop.f32.mrf.mxu0
        %451 = vmatprep.mubr.bf16.mxu0 0
        %452 = vmatmul.mubr.bf16.gmra.mxu0 %v332
        %v453 = vpop.f32.mrf.mxu0
        %v454 = vadd.f32 %v213, %v453
        %v455 = vpop.f32.mrf.mxu0
        %v456 = vpop.f32.mrf.mxu0
        %v457 = vadd.f32 %v213, %v456
        %v458 = vpop.f32.mrf.mxu0
        %459 = vmatprep.mubr.bf16.mxu0 0
        %460 = vmatmul.mubr.bf16.gmra.mxu0 %v335
        %v461 = vpop.f32.mrf.mxu0
        %v462 = vadd.f32 %v213, %v461
        %v463 = vpop.f32.mrf.mxu0
        %v464 = vpop.f32.mrf.mxu0
        %v465 = vadd.f32 %v213, %v464
        %v466 = vpop.f32.mrf.mxu0
        %467 = vmatprep.mubr.bf16.mxu0 0
        %468 = vmatmul.mubr.bf16.gmra.mxu0 %v338
        %v469 = vpop.f32.mrf.mxu0
        %v470 = vadd.f32 %v213, %v469
        %v471 = vpop.f32.mrf.mxu0
        %v472 = vpop.f32.mrf.mxu0
        %v473 = vadd.f32 %v213, %v472
        %v474 = vpop.f32.mrf.mxu0
        %475 = vmatprep.mubr.bf16.mxu0 0
        %476 = vmatmul.mubr.bf16.gmra.mxu0 %v341
        %v477 = vpop.f32.mrf.mxu0
        %v478 = vadd.f32 %v213, %v477
        %v479 = vpop.f32.mrf.mxu0
        %v480 = vpop.f32.mrf.mxu0
        %v481 = vadd.f32 %v213, %v480
        %v482 = vpop.f32.mrf.mxu0
        %483 = vmatprep.mubr.bf16.mxu0 0
        %484 = vmatmul.mubr.bf16.gmra.mxu0 %v344
        %v485 = vpop.f32.mrf.mxu0
        %v486 = vadd.f32 %v213, %v485
        %v487 = vpop.f32.mrf.mxu0
        %v488 = vpop.f32.mrf.mxu0
        %v489 = vadd.f32 %v213, %v488
        %v490 = vpop.f32.mrf.mxu0
        %491 = vmatprep.mubr.bf16.mxu0 0
        %492 = vmatmul.mubr.bf16.gmra.mxu0 %v347
        %v493 = vpop.f32.mrf.mxu0
        %v494 = vadd.f32 %v213, %v493
        %v495 = vpop.f32.mrf.mxu0
        %v496 = vpop.f32.mrf.mxu0
        %v497 = vadd.f32 %v213, %v496
        %v498 = vpop.f32.mrf.mxu0
        %499 = vmatprep.mubr.bf16.mxu0 0
        %500 = vmatmul.mubr.bf16.gmra.mxu0 %v350
        %v501 = vpop.f32.mrf.mxu0
        %v502 = vadd.f32 %v213, %v501
        %v503 = vpop.f32.mrf.mxu0
        %v504 = vpop.f32.mrf.mxu0
        %v505 = vadd.f32 %v213, %v504
        %v506 = vpop.f32.mrf.mxu0
        %507 = vmatprep.mubr.bf16.mxu0 0
        %508 = vmatmul.mubr.bf16.gmra.mxu0 %v353
        %v509 = vpop.f32.mrf.mxu0
        %v510 = vadd.f32 %v213, %v509
        %v511 = vpop.f32.mrf.mxu0
        %v512 = vpop.f32.mrf.mxu0
        %v513 = vadd.f32 %v213, %v512
        %v514 = vpop.f32.mrf.mxu0
        %515 = vdwg.mxu0
        %516 = vadd.xlane.f32.xlu0 %v390
        %v517 = vpop.xlane.xlu0 %516
        %518 = vadd.xlane.f32.xlu0 %v393
        %v519 = vpop.xlane.xlu0 %518
        %520 = vadd.xlane.f32.xlu0 %v398
        %v521 = vpop.xlane.xlu0 %520
        %522 = vadd.xlane.f32.xlu0 %v401
        %v523 = vpop.xlane.xlu0 %522
        %524 = vadd.xlane.f32.xlu0 %v406
        %v525 = vpop.xlane.xlu0 %524
        %526 = vadd.xlane.f32.xlu0 %v409
        %v527 = vpop.xlane.xlu0 %526
        %528 = vadd.xlane.f32.xlu0 %v414
        %v529 = vpop.xlane.xlu0 %528
        %530 = vadd.xlane.f32.xlu0 %v417
        %v531 = vpop.xlane.xlu0 %530
        %532 = vadd.xlane.f32.xlu0 %v422
        %v533 = vpop.xlane.xlu0 %532
        %534 = vadd.xlane.f32.xlu0 %v425
        %v535 = vpop.xlane.xlu0 %534
        %536 = vadd.xlane.f32.xlu0 %v430
        %v537 = vpop.xlane.xlu0 %536
        %538 = vadd.xlane.f32.xlu0 %v433
        %v539 = vpop.xlane.xlu0 %538
        %540 = vadd.xlane.f32.xlu0 %v438
        %v541 = vpop.xlane.xlu0 %540
        %542 = vadd.xlane.f32.xlu0 %v441
        %v543 = vpop.xlane.xlu0 %542
        %544 = vadd.xlane.f32.xlu0 %v446
        %v545 = vpop.xlane.xlu0 %544
        %546 = vadd.xlane.f32.xlu0 %v449
        %v547 = vpop.xlane.xlu0 %546
        %548 = vadd.xlane.f32.xlu0 %v454
        %v549 = vpop.xlane.xlu0 %548
        %550 = vadd.xlane.f32.xlu0 %v457
        %v551 = vpop.xlane.xlu0 %550
        %552 = vadd.xlane.f32.xlu0 %v462
        %v553 = vpop.xlane.xlu0 %552
        %554 = vadd.xlane.f32.xlu0 %v465
        %v555 = vpop.xlane.xlu0 %554
        %556 = vadd.xlane.f32.xlu0 %v470
        %v557 = vpop.xlane.xlu0 %556
        %558 = vadd.xlane.f32.xlu0 %v473
        %v559 = vpop.xlane.xlu0 %558
        %560 = vadd.xlane.f32.xlu0 %v478
        %v561 = vpop.xlane.xlu0 %560
        %562 = vadd.xlane.f32.xlu0 %v481
        %v563 = vpop.xlane.xlu0 %562
        %564 = vadd.xlane.f32.xlu0 %v486
        %v565 = vpop.xlane.xlu0 %564
        %566 = vadd.xlane.f32.xlu0 %v489
        %v567 = vpop.xlane.xlu0 %566
        %568 = vadd.xlane.f32.xlu0 %v494
        %v569 = vpop.xlane.xlu0 %568
        %570 = vadd.xlane.f32.xlu0 %v497
        %v571 = vpop.xlane.xlu0 %570
        %572 = vadd.xlane.f32.xlu0 %v502
        %v573 = vpop.xlane.xlu0 %572
        %574 = vadd.xlane.f32.xlu0 %v505
        %v575 = vpop.xlane.xlu0 %574
        %576 = vadd.xlane.f32.xlu0 %v510
        %v577 = vpop.xlane.xlu0 %576
        %578 = vadd.xlane.f32.xlu0 %v513
        %v579 = vpop.xlane.xlu0 %578
        %v580 = vmul.f32 %v517, 0.0078125
        %v581 = vmul.f32 %v519, 0.0078125
        %v582 = vmul.f32 %v521, 0.0078125
        %v583 = vmul.f32 %v523, 0.0078125
        %v584 = vmul.f32 %v525, 0.0078125
        %v585 = vmul.f32 %v527, 0.0078125
        %v586 = vmul.f32 %v529, 0.0078125
        %v587 = vmul.f32 %v531, 0.0078125
        %v588 = vmul.f32 %v533, 0.0078125
        %v589 = vmul.f32 %v535, 0.0078125
        %v590 = vmul.f32 %v537, 0.0078125
        %v591 = vmul.f32 %v539, 0.0078125
        %v592 = vmul.f32 %v541, 0.0078125
        %v593 = vmul.f32 %v543, 0.0078125
        %v594 = vmul.f32 %v545, 0.0078125
        %v595 = vmul.f32 %v547, 0.0078125
        %v596 = vmul.f32 %v549, 0.0078125
        %v597 = vmul.f32 %v551, 0.0078125
        %v598 = vmul.f32 %v553, 0.0078125
        %v599 = vmul.f32 %v555, 0.0078125
        %v600 = vmul.f32 %v557, 0.0078125
        %v601 = vmul.f32 %v559, 0.0078125
        %v602 = vmul.f32 %v561, 0.0078125
        %v603 = vmul.f32 %v563, 0.0078125
        %v604 = vmul.f32 %v565, 0.0078125
        %v605 = vmul.f32 %v567, 0.0078125
        %v606 = vmul.f32 %v569, 0.0078125
        %v607 = vmul.f32 %v571, 0.0078125
        %v608 = vmul.f32 %v573, 0.0078125
        %v609 = vmul.f32 %v575, 0.0078125
        %v610 = vmul.f32 %v577, 0.0078125
        %v611 = vmul.f32 %v579, 0.0078125
        %v612 = vsub.f32 %v390, %v580
        %v613 = vsub.f32 %v393, %v581
        %v614 = vsub.f32 %v398, %v582
        %v615 = vsub.f32 %v401, %v583
        %v616 = vsub.f32 %v406, %v584
        %v617 = vsub.f32 %v409, %v585
        %v618 = vsub.f32 %v414, %v586
        %v619 = vsub.f32 %v417, %v587
        %v620 = vsub.f32 %v422, %v588
        %v621 = vsub.f32 %v425, %v589
        %v622 = vsub.f32 %v430, %v590
        %v623 = vsub.f32 %v433, %v591
        %v624 = vsub.f32 %v438, %v592
        %v625 = vsub.f32 %v441, %v593
        %v626 = vsub.f32 %v446, %v594
        %v627 = vsub.f32 %v449, %v595
        %v628 = vsub.f32 %v454, %v596
        %v629 = vsub.f32 %v457, %v597
        %v630 = vsub.f32 %v462, %v598
        %v631 = vsub.f32 %v465, %v599
        %v632 = vsub.f32 %v470, %v600
        %v633 = vsub.f32 %v473, %v601
        %v634 = vsub.f32 %v478, %v602
        %v635 = vsub.f32 %v481, %v603
        %v636 = vsub.f32 %v486, %v604
        %v637 = vsub.f32 %v489, %v605
        %v638 = vsub.f32 %v494, %v606
        %v639 = vsub.f32 %v497, %v607
        %v640 = vsub.f32 %v502, %v608
        %v641 = vsub.f32 %v505, %v609
        %v642 = vsub.f32 %v510, %v610
        %v643 = vsub.f32 %v513, %v611
        %v644 = vmul.f32 %v612, %v612
        %v645 = vmul.f32 %v613, %v613
        %v646 = vmul.f32 %v614, %v614
        %v647 = vmul.f32 %v615, %v615
        %v648 = vmul.f32 %v616, %v616
        %v649 = vmul.f32 %v617, %v617
        %v650 = vmul.f32 %v618, %v618
        %v651 = vmul.f32 %v619, %v619
        %v652 = vmul.f32 %v620, %v620
        %v653 = vmul.f32 %v621, %v621
        %v654 = vmul.f32 %v622, %v622
        %v655 = vmul.f32 %v623, %v623
        %v656 = vmul.f32 %v624, %v624
        %v657 = vmul.f32 %v625, %v625
        %v658 = vmul.f32 %v626, %v626
        %v659 = vmul.f32 %v627, %v627
        %v660 = vmul.f32 %v628, %v628
        %v661 = vmul.f32 %v629, %v629
        %v662 = vmul.f32 %v630, %v630
        %v663 = vmul.f32 %v631, %v631
        %v664 = vmul.f32 %v632, %v632
        %v665 = vmul.f32 %v633, %v633
        %v666 = vmul.f32 %v634, %v634
        %v667 = vmul.f32 %v635, %v635
        %v668 = vmul.f32 %v636, %v636
        %v669 = vmul.f32 %v637, %v637
        %v670 = vmul.f32 %v638, %v638
        %v671 = vmul.f32 %v639, %v639
        %v672 = vmul.f32 %v640, %v640
        %v673 = vmul.f32 %v641, %v641
        %v674 = vmul.f32 %v642, %v642
        %v675 = vmul.f32 %v643, %v643
        %676 = vadd.xlane.f32.xlu0 %v644
        %v677 = vpop.xlane.xlu0 %676
        %678 = vadd.xlane.f32.xlu0 %v645
        %v679 = vpop.xlane.xlu0 %678
        %680 = vadd.xlane.f32.xlu0 %v646
        %v681 = vpop.xlane.xlu0 %680
        %682 = vadd.xlane.f32.xlu0 %v647
        %v683 = vpop.xlane.xlu0 %682
        %684 = vadd.xlane.f32.xlu0 %v648
        %v685 = vpop.xlane.xlu0 %684
        %686 = vadd.xlane.f32.xlu0 %v649
        %v687 = vpop.xlane.xlu0 %686
        %688 = vadd.xlane.f32.xlu0 %v650
        %v689 = vpop.xlane.xlu0 %688
        %690 = vadd.xlane.f32.xlu0 %v651
        %v691 = vpop.xlane.xlu0 %690
        %692 = vadd.xlane.f32.xlu0 %v652
        %v693 = vpop.xlane.xlu0 %692
        %694 = vadd.xlane.f32.xlu0 %v653
        %v695 = vpop.xlane.xlu0 %694
        %696 = vadd.xlane.f32.xlu0 %v654
        %v697 = vpop.xlane.xlu0 %696
        %698 = vadd.xlane.f32.xlu0 %v655
        %v699 = vpop.xlane.xlu0 %698
        %700 = vadd.xlane.f32.xlu0 %v656
        %v701 = vpop.xlane.xlu0 %700
        %702 = vadd.xlane.f32.xlu0 %v657
        %v703 = vpop.xlane.xlu0 %702
        %704 = vadd.xlane.f32.xlu0 %v658
        %v705 = vpop.xlane.xlu0 %704
        %706 = vadd.xlane.f32.xlu0 %v659
        %v707 = vpop.xlane.xlu0 %706
        %708 = vadd.xlane.f32.xlu0 %v660
        %v709 = vpop.xlane.xlu0 %708
        %710 = vadd.xlane.f32.xlu0 %v661
        %v711 = vpop.xlane.xlu0 %710
        %712 = vadd.xlane.f32.xlu0 %v662
        %v713 = vpop.xlane.xlu0 %712
        %714 = vadd.xlane.f32.xlu0 %v663
        %v715 = vpop.xlane.xlu0 %714
        %716 = vadd.xlane.f32.xlu0 %v664
        %v717 = vpop.xlane.xlu0 %716
        %718 = vadd.xlane.f32.xlu0 %v665
        %v719 = vpop.xlane.xlu0 %718
        %720 = vadd.xlane.f32.xlu0 %v666
        %v721 = vpop.xlane.xlu0 %720
        %722 = vadd.xlane.f32.xlu0 %v667
        %v723 = vpop.xlane.xlu0 %722
        %724 = vadd.xlane.f32.xlu0 %v668
        %v725 = vpop.xlane.xlu0 %724
        %726 = vadd.xlane.f32.xlu0 %v669
        %v727 = vpop.xlane.xlu0 %726
        %728 = vadd.xlane.f32.xlu0 %v670
        %v729 = vpop.xlane.xlu0 %728
        %730 = vadd.xlane.f32.xlu0 %v671
        %v731 = vpop.xlane.xlu0 %730
        %732 = vadd.xlane.f32.xlu0 %v672
        %v733 = vpop.xlane.xlu0 %732
        %734 = vadd.xlane.f32.xlu0 %v673
        %v735 = vpop.xlane.xlu0 %734
        %736 = vadd.xlane.f32.xlu0 %v674
        %v737 = vpop.xlane.xlu0 %736
        %738 = vadd.xlane.f32.xlu0 %v675
        %v739 = vpop.xlane.xlu0 %738
        %v740 = vmul.f32 %v677, 0.0078125
        %v741 = vmul.f32 %v679, 0.0078125
        %v742 = vmul.f32 %v681, 0.0078125
        %v743 = vmul.f32 %v683, 0.0078125
        %v744 = vmul.f32 %v685, 0.0078125
        %v745 = vmul.f32 %v687, 0.0078125
        %v746 = vmul.f32 %v689, 0.0078125
        %v747 = vmul.f32 %v691, 0.0078125
        %v748 = vmul.f32 %v693, 0.0078125
        %v749 = vmul.f32 %v695, 0.0078125
        %v750 = vmul.f32 %v697, 0.0078125
        %v751 = vmul.f32 %v699, 0.0078125
        %v752 = vmul.f32 %v701, 0.0078125
        %v753 = vmul.f32 %v703, 0.0078125
        %v754 = vmul.f32 %v705, 0.0078125
        %v755 = vmul.f32 %v707, 0.0078125
        %v756 = vmul.f32 %v709, 0.0078125
        %v757 = vmul.f32 %v711, 0.0078125
        %v758 = vmul.f32 %v713, 0.0078125
        %v759 = vmul.f32 %v715, 0.0078125
        %v760 = vmul.f32 %v717, 0.0078125
        %v761 = vmul.f32 %v719, 0.0078125
        %v762 = vmul.f32 %v721, 0.0078125
        %v763 = vmul.f32 %v723, 0.0078125
        %v764 = vmul.f32 %v725, 0.0078125
        %v765 = vmul.f32 %v727, 0.0078125
        %v766 = vmul.f32 %v729, 0.0078125
        %v767 = vmul.f32 %v731, 0.0078125
        %v768 = vmul.f32 %v733, 0.0078125
        %v769 = vmul.f32 %v735, 0.0078125
        %v770 = vmul.f32 %v737, 0.0078125
        %v771 = vmul.f32 %v739, 0.0078125
        %v772 = vadd.f32 %v740, 1e-05
        %v773 = vadd.f32 %v741, 1e-05
        %v774 = vadd.f32 %v742, 1e-05
        %v775 = vadd.f32 %v743, 1e-05
        %v776 = vadd.f32 %v744, 1e-05
        %v777 = vadd.f32 %v745, 1e-05
        %v778 = vadd.f32 %v746, 1e-05
        %v779 = vadd.f32 %v747, 1e-05
        %v780 = vadd.f32 %v748, 1e-05
        %v781 = vadd.f32 %v749, 1e-05
        %v782 = vadd.f32 %v750, 1e-05
        %v783 = vadd.f32 %v751, 1e-05
        %v784 = vadd.f32 %v752, 1e-05
        %v785 = vadd.f32 %v753, 1e-05
        %v786 = vadd.f32 %v754, 1e-05
        %v787 = vadd.f32 %v755, 1e-05
        %v788 = vadd.f32 %v756, 1e-05
        %v789 = vadd.f32 %v757, 1e-05
        %v790 = vadd.f32 %v758, 1e-05
        %v791 = vadd.f32 %v759, 1e-05
        %v792 = vadd.f32 %v760, 1e-05
        %v793 = vadd.f32 %v761, 1e-05
        %v794 = vadd.f32 %v762, 1e-05
        %v795 = vadd.f32 %v763, 1e-05
        %v796 = vadd.f32 %v764, 1e-05
        %v797 = vadd.f32 %v765, 1e-05
        %v798 = vadd.f32 %v766, 1e-05
        %v799 = vadd.f32 %v767, 1e-05
        %v800 = vadd.f32 %v768, 1e-05
        %v801 = vadd.f32 %v769, 1e-05
        %v802 = vadd.f32 %v770, 1e-05
        %v803 = vadd.f32 %v771, 1e-05
        %v804 = vrsqrt.pop %v772
        %v805 = vrsqrt.pop %v773
        %v806 = vrsqrt.pop %v774
        %v807 = vrsqrt.pop %v775
        %v808 = vrsqrt.pop %v776
        %v809 = vrsqrt.pop %v777
        %v810 = vrsqrt.pop %v778
        %v811 = vrsqrt.pop %v779
        %v812 = vrsqrt.pop %v780
        %v813 = vrsqrt.pop %v781
        %v814 = vrsqrt.pop %v782
        %v815 = vrsqrt.pop %v783
        %v816 = vrsqrt.pop %v784
        %v817 = vrsqrt.pop %v785
        %v818 = vrsqrt.pop %v786
        %v819 = vrsqrt.pop %v787
        %v820 = vrsqrt.pop %v788
        %v821 = vrsqrt.pop %v789
        %v822 = vrsqrt.pop %v790
        %v823 = vrsqrt.pop %v791
        %v824 = vrsqrt.pop %v792
        %v825 = vrsqrt.pop %v793
        %v826 = vrsqrt.pop %v794
        %v827 = vrsqrt.pop %v795
        %v828 = vrsqrt.pop %v796
        %v829 = vrsqrt.pop %v797
        %v830 = vrsqrt.pop %v798
        %v831 = vrsqrt.pop %v799
        %v832 = vrsqrt.pop %v800
        %v833 = vrsqrt.pop %v801
        %v834 = vrsqrt.pop %v802
        %v835 = vrsqrt.pop %v803
        %v836 = vmul.f32 %v612, %v804
        %v837 = vmul.f32 %v613, %v805
        %v838 = vmul.f32 %v614, %v806
        %v839 = vmul.f32 %v615, %v807
        %v840 = vmul.f32 %v616, %v808
        %v841 = vmul.f32 %v617, %v809
        %v842 = vmul.f32 %v618, %v810
        %v843 = vmul.f32 %v619, %v811
        %v844 = vmul.f32 %v620, %v812
        %v845 = vmul.f32 %v621, %v813
        %v846 = vmul.f32 %v622, %v814
        %v847 = vmul.f32 %v623, %v815
        %v848 = vmul.f32 %v624, %v816
        %v849 = vmul.f32 %v625, %v817
        %v850 = vmul.f32 %v626, %v818
        %v851 = vmul.f32 %v627, %v819
        %v852 = vmul.f32 %v628, %v820
        %v853 = vmul.f32 %v629, %v821
        %v854 = vmul.f32 %v630, %v822
        %v855 = vmul.f32 %v631, %v823
        %v856 = vmul.f32 %v632, %v824
        %v857 = vmul.f32 %v633, %v825
        %v858 = vmul.f32 %v634, %v826
        %v859 = vmul.f32 %v635, %v827
        %v860 = vmul.f32 %v636, %v828
        %v861 = vmul.f32 %v637, %v829
        %v862 = vmul.f32 %v638, %v830
        %v863 = vmul.f32 %v639, %v831
        %v864 = vmul.f32 %v640, %v832
        %v865 = vmul.f32 %v641, %v833
        %v866 = vmul.f32 %v642, %v834
        %v867 = vmul.f32 %v643, %v835
        %v868 = vlaneseq
        %v869 = vshrl.u32 %v868, 7
        %v870 = vsub.s32 1, %v869
        %v871 = vrot.slane %v209, %v870
        %v872 = vmul.f32 %v836, %v871
        %v873 = vmul.f32 %v837, %v871
        %v874 = vmul.f32 %v838, %v871
        %v875 = vmul.f32 %v839, %v871
        %v876 = vmul.f32 %v840, %v871
        %v877 = vmul.f32 %v841, %v871
        %v878 = vmul.f32 %v842, %v871
        %v879 = vmul.f32 %v843, %v871
        %v880 = vmul.f32 %v844, %v871
        %v881 = vmul.f32 %v845, %v871
        %v882 = vmul.f32 %v846, %v871
        %v883 = vmul.f32 %v847, %v871
        %v884 = vmul.f32 %v848, %v871
        %v885 = vmul.f32 %v849, %v871
        %v886 = vmul.f32 %v850, %v871
        %v887 = vmul.f32 %v851, %v871
        %v888 = vmul.f32 %v852, %v871
        %v889 = vmul.f32 %v853, %v871
        %v890 = vmul.f32 %v854, %v871
        %v891 = vmul.f32 %v855, %v871
        %v892 = vmul.f32 %v856, %v871
        %v893 = vmul.f32 %v857, %v871
        %v894 = vmul.f32 %v858, %v871
        %v895 = vmul.f32 %v859, %v871
        %v896 = vmul.f32 %v860, %v871
        %v897 = vmul.f32 %v861, %v871
        %v898 = vmul.f32 %v862, %v871
        %v899 = vmul.f32 %v863, %v871
        %v900 = vmul.f32 %v864, %v871
        %v901 = vmul.f32 %v865, %v871
        %v902 = vmul.f32 %v866, %v871
        %v903 = vmul.f32 %v867, %v871
        %v904 = vlaneseq
        %v905 = vshrl.u32 %v904, 7
        %v906 = vsub.s32 2, %v905
        %v907 = vrot.slane %v209, %v906
        %v908 = vadd.f32 %v872, %v907
        %v909 = vadd.f32 %v873, %v907
        %v910 = vadd.f32 %v874, %v907
        %v911 = vadd.f32 %v875, %v907
        %v912 = vadd.f32 %v876, %v907
        %v913 = vadd.f32 %v877, %v907
        %v914 = vadd.f32 %v878, %v907
        %v915 = vadd.f32 %v879, %v907
        %v916 = vadd.f32 %v880, %v907
        %v917 = vadd.f32 %v881, %v907
        %v918 = vadd.f32 %v882, %v907
        %v919 = vadd.f32 %v883, %v907
        %v920 = vadd.f32 %v884, %v907
        %v921 = vadd.f32 %v885, %v907
        %v922 = vadd.f32 %v886, %v907
        %v923 = vadd.f32 %v887, %v907
        %v924 = vadd.f32 %v888, %v907
        %v925 = vadd.f32 %v889, %v907
        %v926 = vadd.f32 %v890, %v907
        %v927 = vadd.f32 %v891, %v907
        %v928 = vadd.f32 %v892, %v907
        %v929 = vadd.f32 %v893, %v907
        %v930 = vadd.f32 %v894, %v907
        %v931 = vadd.f32 %v895, %v907
        %v932 = vadd.f32 %v896, %v907
        %v933 = vadd.f32 %v897, %v907
        %v934 = vadd.f32 %v898, %v907
        %v935 = vadd.f32 %v899, %v907
        %v936 = vadd.f32 %v900, %v907
        %v937 = vadd.f32 %v901, %v907
        %v938 = vadd.f32 %v902, %v907
        %v939 = vadd.f32 %v903, %v907
        %940 = vst [vmem:[%s164] sm:$0xff] %v908
        %941 = vst [vmem:[%s164 + $0x8] sm:$0xff] %v909
        %942 = vst [vmem:[%s164 + $0x10] sm:$0xff] %v910
        %943 = vst [vmem:[%s164 + $0x18] sm:$0xff] %v911
        %944 = vst [vmem:[%s164 + $0x20] sm:$0xff] %v912
        %945 = vst [vmem:[%s164 + $0x28] sm:$0xff] %v913
        %946 = vst [vmem:[%s164 + $0x30] sm:$0xff] %v914
        %947 = vst [vmem:[%s164 + $0x38] sm:$0xff] %v915
        %948 = vst [vmem:[%s164 + $0x40] sm:$0xff] %v916
        %949 = vst [vmem:[%s164 + $0x48] sm:$0xff] %v917
        %950 = vst [vmem:[%s164 + $0x50] sm:$0xff] %v918
        %951 = vst [vmem:[%s164 + $0x58] sm:$0xff] %v919
        %952 = vst [vmem:[%s164 + $0x60] sm:$0xff] %v920
        %953 = vst [vmem:[%s164 + $0x68] sm:$0xff] %v921
        %954 = vst [vmem:[%s164 + $0x70] sm:$0xff] %v922
        %955 = vst [vmem:[%s164 + $0x78] sm:$0xff] %v923
        %956 = vst [vmem:[%s164 + $0x80] sm:$0xff] %v924
        %957 = vst [vmem:[%s164 + $0x88] sm:$0xff] %v925
        %958 = vst [vmem:[%s164 + $0x90] sm:$0xff] %v926
        %959 = vst [vmem:[%s164 + $0x98] sm:$0xff] %v927
        %960 = vst [vmem:[%s164 + $0xa0] sm:$0xff] %v928
        %961 = vst [vmem:[%s164 + $0xa8] sm:$0xff] %v929
        %962 = vst [vmem:[%s164 + $0xb0] sm:$0xff] %v930
        %963 = vst [vmem:[%s164 + $0xb8] sm:$0xff] %v931
        %964 = vst [vmem:[%s164 + $0xc0] sm:$0xff] %v932
        %965 = vst [vmem:[%s164 + $0xc8] sm:$0xff] %v933
        %966 = vst [vmem:[%s164 + $0xd0] sm:$0xff] %v934
        %967 = vst [vmem:[%s164 + $0xd8] sm:$0xff] %v935
        %968 = vst [vmem:[%s164 + $0xe0] sm:$0xff] %v936
        %969 = vst [vmem:[%s164 + $0xe8] sm:$0xff] %v937
        %970 = vst [vmem:[%s164 + $0xf0] sm:$0xff] %v938
        %971 = vst [vmem:[%s164 + $0xf8] sm:$0xff] %v939
        %s972 = sand.u32 %s93, 1
        %s973 = scalar_lea.sflag [#allocation3], %s972
        %s974 = sand.u32 %s93, 1
        %s975 = smul.addr %s974, 256
        %s976 = scalar_lea.vmem [#allocation2], %s975
        // Predicated region
        $region33: #{_forward.1} parent=31 // pred_check
          %p977 = pneg %p103
        $region34: #{_forward.1} parent=31 // pred_check_branch
          %979 = sbr.rel (%p977) target = $region36
        $region35: #{_forward.1} parent=31 // pred_region
          %s980 = smul.u32 32, %s17
          %s982 = ssub.s32 4096, 4096
          %983 = vsyncadd %s973, %s982
          %s984 = smul.addr %s980, 128
          %s985 = scalar_lea.hbm %s3, %s984
          %s986 = sshll.u32 %s976, 4
          %s987 = int_to_ptr.vmem [resolvable:$true] %s986
          %992 = dma.vmem_to_hbm [thread:$0]  %s987, 4096, %s985, %s973, 128, 128, 8
        $region36: #{_forward.1} parent=31 // pred_fallthru
          _
      $region32: #{_forward.1} parent=5 // pred_fallthru
        _
      %p993 = scmp.le.s32.totalorder 2, %s12
      // Predicated region
      $region37: #{_forward.1} parent=5 // pred_check
        %p994 = pneg %p993
      $region38: #{_forward.1} parent=5 // pred_check_branch
        %996 = sbr.rel (%p994) target = $region40
      $region39: #{_forward.1} parent=5 // pred_region
        %s997 = ssub.s32 %s12, 2
        // Predicated region
        $region41: #{_forward.1} parent=39 // pred_check
          %p998 = pneg %p109
        $region42: #{_forward.1} parent=39 // pred_check_branch
          %1000 = sbr.rel (%p998) target = $region44
        $region43: #{_forward.1} parent=39 // pred_region
          %s1001 = sand.u32 %s94, 1
          %s1002 = scalar_lea.sflag [#allocation3], %s1001
          %s1003 = sand.u32 %s94, 1
          %s1004 = smul.addr %s1003, 256
          %s1005 = scalar_lea.vmem [#allocation2], %s1004
          %1006 = dma.done %s1002, 4096
        $region44: #{_forward.1} parent=39 // pred_fallthru
          _
      $region40: #{_forward.1} parent=5 // pred_fallthru
        _
    $region6: #{_forward.1} parent=1 // loop_footer
      %s16 = sadd.s32 1, %s12
    $region7: #{_forward.1} parent=1 // loop_footer_branch
      %11 = sbr.rel target = $region3
    $region8: #{_forward.1} parent=1 // loop_exit
      _
    %1007 = vsyncpa [#allocation3], 1
    %s1008 = scalar_lea.sflag [#allocation3], 1
    %1009 = vsyncpa %s1008, 1

</llo_original>
